<compile_context>
chip_gen: v5e
topology: v5e:2x2
jax: 0.10.0
libtpu: 0.0.40
codegen_flags: <defaults>
</compile_context>

<pallas_src>
import functools
import math

import jax
import jax.numpy as jnp
from jax.experimental import pallas as pl
from jax.experimental.pallas import tpu as pltpu


def _largest_tile(n: int, preferred) -> int:
    """Largest candidate that divides n; fall back to n (full extent)."""
    for c in preferred:
        if c <= n and n % c == 0:
            return c
    return n


def _encoder_kernel(x_ref, w_in_ref, b_in_ref, w1_ref, b1_ref, w2_ref, b2_ref,
                    o_ref, acc_ref, *, n_k_tiles: int):
    s = pl.program_id(1)
    n_steps = pl.num_programs(1)

    # Zero the accumulator at the first step of every batch tile.
    @pl.when(s == 0)
    def _():
        acc_ref[...] = jnp.zeros_like(acc_ref)

    # Phase 1: K-tiled input projection (acc += x_tile @ w_in_tile).
    @pl.when(s < n_k_tiles)
    def _():
        x = x_ref[...].astype(w_in_ref.dtype)
        acc_ref[...] += jnp.dot(x, w_in_ref[...],
                                preferred_element_type=jnp.float32)

    # End of phase 1: bias + ReLU -> h.
    @pl.when(s == n_k_tiles - 1)
    def _():
        acc_ref[...] = jnp.maximum(acc_ref[...] + b_in_ref[...], 0.0)

    # Phase 2: one residual MLP block per grid step (weights streamed per block).
    @pl.when(s >= n_k_tiles)
    def _():
        h = acc_ref[...]
        y = jnp.dot(h.astype(w1_ref.dtype), w1_ref[0],
                    preferred_element_type=jnp.float32) + b1_ref[0]
        y = jnp.maximum(y, 0.0)
        y = jnp.dot(y.astype(w2_ref.dtype), w2_ref[0],
                    preferred_element_type=jnp.float32) + b2_ref[0]
        acc_ref[...] = jnp.maximum(h + y, 0.0)

    # Final step: write the output tile once (lane-dense (bt, H) slab).
    @pl.when(s == n_steps - 1)
    def _():
        o_ref[...] = acc_ref[...].astype(o_ref.dtype)


def representation_forward(observation, params, *, num_blocks: int,
                           weight_dtype=jnp.float32,
                           batch_tile=None, k_tile=None):
    """observation: (B, *obs_shape) float. Returns (B, hidden_dim) float32."""
    b = observation.shape[0]
    x = observation.reshape(b, -1).astype(jnp.float32)   # flatten row-major
    f = x.shape[1]

    w_in = params["w_in"].astype(weight_dtype)
    w1 = params["w1"].astype(weight_dtype)
    w2 = params["w2"].astype(weight_dtype)
    b_in = params["b_in"].astype(jnp.float32)
    b1 = params["b1"].astype(jnp.float32)
    b2 = params["b2"].astype(jnp.float32)
    hidden_dim = w_in.shape[1]
    assert num_blocks >= 1 and w1.shape[0] == num_blocks

    # Tile choices: batch tile a multiple of 8 (or full B), K tile a multiple
    # of 128 (or full F) so block shapes respect the (8, 128) grain.
    bt = batch_tile or _largest_tile(b, (256, 128, 64, 32, 16, 8))
    tk = k_tile or _largest_tile(f, (512, 1024, 256, 128))
    n_bt = b // bt
    n_k = f // tk
    n_steps = n_k + num_blocks
    last_k = n_k - 1

    w_bytes = jnp.dtype(weight_dtype).itemsize

    # Bounded VMEM budget: double-buffered per-step tiles + the h scratch.
    per_step_bytes = (bt * tk * 4                      # x K-slab
                      + tk * hidden_dim * w_bytes      # w_in K-slab
                      + hidden_dim * 4                 # b_in
                      + 2 * hidden_dim * hidden_dim * w_bytes   # w1, w2 block
                      + 2 * hidden_dim * 4             # b1, b2
                      + bt * hidden_dim * 4)           # out tile
    est = 2 * per_step_bytes + bt * hidden_dim * 4
    vmem_limit = int(min(max(2 * est + (4 << 20), 32 << 20), 64 << 20))

    flops = 2 * b * (f * hidden_dim + num_blocks * 2 * hidden_dim * hidden_dim)
    bytes_accessed = int(x.size * 4
                         + (w_in.size + w1.size + w2.size) * w_bytes
                         + (b_in.size + b1.size + b2.size) * 4
                         + b * hidden_dim * 4)
    cost = pl.CostEstimate(flops=flops, transcendentals=0,
                           bytes_accessed=bytes_accessed)

    # Index maps clamp into range; Pallas skips re-DMA when the block index is
    # unchanged between consecutive steps, so the clamping wastes no bandwidth.
    x_map = lambda i, s: (i, jnp.minimum(s, last_k))
    w_in_map = lambda i, s: (jnp.minimum(s, last_k), 0)
    blk2 = lambda i, s: (jnp.maximum(s - n_k, 0), 0, 0)

    kernel = functools.partial(_encoder_kernel, n_k_tiles=n_k)
    grid_spec = pltpu.PrefetchScalarGridSpec(
        num_scalar_prefetch=0,
        grid=(n_bt, n_steps),
        in_specs=[
            pl.BlockSpec((bt, tk), x_map),
            pl.BlockSpec((tk, hidden_dim), w_in_map),
            pl.BlockSpec((1, hidden_dim), lambda i, s: (0, 0)),
            pl.BlockSpec((1, hidden_dim, hidden_dim), blk2),
            pl.BlockSpec((1, 1, hidden_dim), blk2),
            pl.BlockSpec((1, hidden_dim, hidden_dim), blk2),
            pl.BlockSpec((1, 1, hidden_dim), blk2),
        ],
        out_specs=pl.BlockSpec((bt, hidden_dim), lambda i, s: (i, 0)),
        scratch_shapes=[pltpu.VMEM((bt, hidden_dim), jnp.float32)],
    )

    return pl.pallas_call(
        kernel,
        out_shape=jax.ShapeDtypeStruct((b, hidden_dim), jnp.float32),
        grid_spec=grid_spec,
        compiler_params=pltpu.CompilerParams(
            dimension_semantics=("parallel", "arbitrary"),
            vmem_limit_bytes=vmem_limit),
        cost_estimate=cost,
    )(x, w_in, b_in, w1, b1, w2, b2)


def init_params(key, in_features: int, hidden_dim: int, num_blocks: int):
    """Deterministic synthetic parameter init (PyTorch-Linear-like scale)."""
    ks = jax.random.split(key, 6)
    s_in = 1.0 / jnp.sqrt(in_features)
    s_h = 1.0 / jnp.sqrt(hidden_dim)
    return {
        "w_in": jax.random.uniform(ks[0], (in_features, hidden_dim),
                                   jnp.float32, -s_in, s_in),
        "b_in": jax.random.uniform(ks[1], (1, hidden_dim),
                                   jnp.float32, -s_in, s_in),
        "w1": jax.random.uniform(ks[2], (num_blocks, hidden_dim, hidden_dim),
                                 jnp.float32, -s_h, s_h),
        "b1": jax.random.uniform(ks[3], (num_blocks, 1, hidden_dim),
                                 jnp.float32, -s_h, s_h),
        "w2": jax.random.uniform(ks[4], (num_blocks, hidden_dim, hidden_dim),
                                 jnp.float32, -s_h, s_h),
        "b2": jax.random.uniform(ks[5], (num_blocks, 1, hidden_dim),
                                 jnp.float32, -s_h, s_h),
    }


def reference_forward(observation, params, *, num_blocks: int):
    """Pure-JAX reference of the same forward pass (for correctness check)."""
    b = observation.shape[0]
    x = observation.reshape(b, -1)
    h = jax.nn.relu(x @ params["w_in"] + params["b_in"])
    for blk in range(num_blocks):
        y = jax.nn.relu(h @ params["w1"][blk] + params["b1"][blk])
        y = y @ params["w2"][blk] + params["b2"][blk]
        h = jax.nn.relu(h + y)
    return h


if __name__ == "__main__":
    # Small shapes consistent with the module: obs (C,H,W)=(4,16,16), batch=2.
    observation_shape = (4, 16, 16)
    hidden_dim = 32
    num_blocks = 2
    batch = 2

    key = jax.random.PRNGKey(0)
    k_obs, k_params = jax.random.split(key)

    obs = jax.random.normal(k_obs, (batch,) + observation_shape, jnp.float32)
    in_features = int(math.prod(observation_shape))
    params = init_params(k_params, in_features, hidden_dim, num_blocks)

    ref = reference_forward(obs, params, num_blocks=num_blocks)

    # f32 weights (exact reference match).
    out = representation_forward(obs, params, num_blocks=num_blocks)
    out = jax.block_until_ready(out)
    assert out.shape == (batch, hidden_dim), out.shape
    assert jnp.allclose(out, ref, atol=1e-5, rtol=1e-5), "f32 mismatch vs reference"

    # bf16 weight path (v6e/v7x MXU fast path, f32 accumulation) — loose tolerance.
    out_bf16 = representation_forward(obs, params, num_blocks=num_blocks,
                                      weight_dtype=jnp.bfloat16)
    out_bf16 = jax.block_until_ready(out_bf16)
    assert jnp.allclose(out_bf16, ref, atol=0.15, rtol=0.15), "bf16 mismatch vs reference"

    print("KERNEL_OK")
</pallas_src>

<mosaic_0001>
module attributes {stable_mosaic.version = 11 : i64} {
  func.func @_encoder_kernel(%arg0: i32, %arg1: i32, %arg2: memref<2x512xf32, #tpu.memory_space<vmem>>, %arg3: memref<512x32xf32, #tpu.memory_space<vmem>>, %arg4: memref<1x32xf32, #tpu.memory_space<vmem>>, %arg5: memref<1x32x32xf32, #tpu.memory_space<vmem>>, %arg6: memref<1x1x32xf32, #tpu.memory_space<vmem>>, %arg7: memref<1x32x32xf32, #tpu.memory_space<vmem>>, %arg8: memref<1x1x32xf32, #tpu.memory_space<vmem>>, %arg9: memref<2x32xf32, #tpu.memory_space<vmem>>, %arg10: memref<2x32xf32, #tpu.memory_space<vmem>>) attributes {dimension_semantics = [#tpu.dimension_semantics<parallel>, #tpu.dimension_semantics<arbitrary>], iteration_bounds = array<i64: 1, 4>, scalar_prefetch = 0 : i64, scratch_operands = 1 : i64, tpu.core_type = #tpu.core_type<tc>, window_params = [{transform_indices = @transform_0, window_bounds = array<i64: 2, 512>}, {transform_indices = @transform_1, window_bounds = array<i64: 512, 32>}, {pipeline_mode = #tpu.pipeline_mode<synchronous>, transform_indices = @transform_2, window_bounds = array<i64: 1, 32>}, {transform_indices = @transform_3, window_bounds = array<i64: 1, 32, 32>}, {transform_indices = @transform_4, window_bounds = array<i64: 1, 1, 32>}, {transform_indices = @transform_5, window_bounds = array<i64: 1, 32, 32>}, {transform_indices = @transform_6, window_bounds = array<i64: 1, 1, 32>}, {transform_indices = @transform_7, window_bounds = array<i64: 2, 32>}]} {
    %c0_i32 = arith.constant 0 : i32
    %0 = arith.cmpi eq, %arg1, %c0_i32 : i32
    %1 = arith.extui %0 : i1 to i32
    %c0_i32_0 = arith.constant 0 : i32
    %2 = arith.cmpi ne, %1, %c0_i32_0 : i32
    scf.if %2 {
      %cst = arith.constant 0.000000e+00 : f32
      %15 = vector.broadcast %cst : f32 to vector<2x32xf32>
      %c0 = arith.constant 0 : index
      %c0_6 = arith.constant 0 : index
      %16 = vector.load %arg10[%c0, %c0_6] : memref<2x32xf32, #tpu.memory_space<vmem>>, vector<2x32xf32>
      tpu.vector_store %arg10[%c0, %c0_6], %15 {strides = array<i32>} : memref<2x32xf32, #tpu.memory_space<vmem>>, vector<2x32xf32>,
    } else {
    }
    %c2_i32 = arith.constant 2 : i32
    %3 = arith.cmpi slt, %arg1, %c2_i32 : i32
    %4 = arith.extui %3 : i1 to i32
    %c0_i32_1 = arith.constant 0 : i32
    %5 = arith.cmpi ne, %4, %c0_i32_1 : i32
    scf.if %5 {
      %c0 = arith.constant 0 : index
      %c0_6 = arith.constant 0 : index
      %15 = vector.load %arg2[%c0, %c0_6] : memref<2x512xf32, #tpu.memory_space<vmem>>, vector<2x512xf32>
      %c0_7 = arith.constant 0 : index
      %c0_8 = arith.constant 0 : index
      %16 = vector.load %arg10[%c0_7, %c0_8] : memref<2x32xf32, #tpu.memory_space<vmem>>, vector<2x32xf32>
      %c0_9 = arith.constant 0 : index
      %c0_10 = arith.constant 0 : index
      %17 = vector.load %arg3[%c0_9, %c0_10] : memref<512x32xf32, #tpu.memory_space<vmem>>, vector<512x32xf32>
      %cst = arith.constant dense<0.000000e+00> : vector<2x32xf32>
      %18 = tpu.matmul %15, %17, %cst {dimension_numbers = #tpu.dot_dimension_numbers<[1], [0], [0], [1], [0, 0, 1, 1], [], []>} : vector<2x512xf32>, vector<512x32xf32>, vector<2x32xf32> -> vector<2x32xf32>
      %19 = arith.addf %16, %18 : vector<2x32xf32>
      %c0_11 = arith.constant 0 : index
      %c0_12 = arith.constant 0 : index
      %20 = vector.load %arg10[%c0_11, %c0_12] : memref<2x32xf32, #tpu.memory_space<vmem>>, vector<2x32xf32>
      tpu.vector_store %arg10[%c0_11, %c0_12], %19 {strides = array<i32>} : memref<2x32xf32, #tpu.memory_space<vmem>>, vector<2x32xf32>,
    } else {
    }
    %c1_i32 = arith.constant 1 : i32
    %6 = arith.cmpi eq, %arg1, %c1_i32 : i32
    %7 = arith.extui %6 : i1 to i32
    %c0_i32_2 = arith.constant 0 : i32
    %8 = arith.cmpi ne, %7, %c0_i32_2 : i32
    scf.if %8 {
      %c0 = arith.constant 0 : index
      %c0_6 = arith.constant 0 : index
      %15 = vector.load %arg10[%c0, %c0_6] : memref<2x32xf32, #tpu.memory_space<vmem>>, vector<2x32xf32>
      %c0_7 = arith.constant 0 : index
      %c0_8 = arith.constant 0 : index
      %16 = vector.load %arg4[%c0_7, %c0_8] : memref<1x32xf32, #tpu.memory_space<vmem>>, vector<1x32xf32>
      %17 = vector.broadcast %16 : vector<1x32xf32> to vector<2x32xf32>
      %18 = arith.addf %15, %17 : vector<2x32xf32>
      %cst = arith.constant 0.000000e+00 : f32
      %19 = vector.broadcast %cst : f32 to vector<2x32xf32>
      %20 = arith.maximumf %18, %19 : vector<2x32xf32>
      %c0_9 = arith.constant 0 : index
      %c0_10 = arith.constant 0 : index
      %21 = vector.load %arg10[%c0_9, %c0_10] : memref<2x32xf32, #tpu.memory_space<vmem>>, vector<2x32xf32>
      tpu.vector_store %arg10[%c0_9, %c0_10], %20 {strides = array<i32>} : memref<2x32xf32, #tpu.memory_space<vmem>>, vector<2x32xf32>,
    } else {
    }
    %c2_i32_3 = arith.constant 2 : i32
    %9 = arith.cmpi sge, %arg1, %c2_i32_3 : i32
    %10 = arith.extui %9 : i1 to i32
    %c0_i32_4 = arith.constant 0 : i32
    %11 = arith.cmpi ne, %10, %c0_i32_4 : i32
    scf.if %11 {
      %c0 = arith.constant 0 : index
      %c0_6 = arith.constant 0 : index
      %15 = vector.load %arg10[%c0, %c0_6] : memref<2x32xf32, #tpu.memory_space<vmem>>, vector<2x32xf32>
      %c0_7 = arith.constant 0 : index
      %c0_8 = arith.constant 0 : index
      %c0_9 = arith.constant 0 : index
      %16 = vector.load %arg5[%c0_7, %c0_8, %c0_9] : memref<1x32x32xf32, #tpu.memory_space<vmem>>, vector<1x32x32xf32>
      %17 = vector.shape_cast %16 : vector<1x32x32xf32> to vector<32x32xf32>
      %cst = arith.constant dense<0.000000e+00> : vector<2x32xf32>
      %18 = tpu.matmul %15, %17, %cst {dimension_numbers = #tpu.dot_dimension_numbers<[1], [0], [0], [1], [0, 0, 1, 1], [], []>} : vector<2x32xf32>, vector<32x32xf32>, vector<2x32xf32> -> vector<2x32xf32>
      %c0_10 = arith.constant 0 : index
      %c0_11 = arith.constant 0 : index
      %c0_12 = arith.constant 0 : index
      %19 = vector.load %arg6[%c0_10, %c0_11, %c0_12] : memref<1x1x32xf32, #tpu.memory_space<vmem>>, vector<1x1x32xf32>
      %20 = vector.shape_cast %19 : vector<1x1x32xf32> to vector<1x32xf32>
      %21 = vector.broadcast %20 : vector<1x32xf32> to vector<2x32xf32>
      %22 = arith.addf %18, %21 : vector<2x32xf32>
      %cst_13 = arith.constant 0.000000e+00 : f32
      %23 = vector.broadcast %cst_13 : f32 to vector<2x32xf32>
      %24 = arith.maximumf %22, %23 : vector<2x32xf32>
      %c0_14 = arith.constant 0 : index
      %c0_15 = arith.constant 0 : index
      %c0_16 = arith.constant 0 : index
      %25 = vector.load %arg7[%c0_14, %c0_15, %c0_16] : memref<1x32x32xf32, #tpu.memory_space<vmem>>, vector<1x32x32xf32>
      %26 = vector.shape_cast %25 : vector<1x32x32xf32> to vector<32x32xf32>
      %cst_17 = arith.constant dense<0.000000e+00> : vector<2x32xf32>
      %27 = tpu.matmul %24, %26, %cst_17 {dimension_numbers = #tpu.dot_dimension_numbers<[1], [0], [0], [1], [0, 0, 1, 1], [], []>} : vector<2x32xf32>, vector<32x32xf32>, vector<2x32xf32> -> vector<2x32xf32>
      %c0_18 = arith.constant 0 : index
      %c0_19 = arith.constant 0 : index
      %c0_20 = arith.constant 0 : index
      %28 = vector.load %arg8[%c0_18, %c0_19, %c0_20] : memref<1x1x32xf32, #tpu.memory_space<vmem>>, vector<1x1x32xf32>
      %29 = vector.shape_cast %28 : vector<1x1x32xf32> to vector<1x32xf32>
      %30 = vector.broadcast %29 : vector<1x32xf32> to vector<2x32xf32>
      %31 = arith.addf %27, %30 : vector<2x32xf32>
      %32 = arith.addf %15, %31 : vector<2x32xf32>
      %cst_21 = arith.constant 0.000000e+00 : f32
      %33 = vector.broadcast %cst_21 : f32 to vector<2x32xf32>
      %34 = arith.maximumf %32, %33 : vector<2x32xf32>
      %c0_22 = arith.constant 0 : index
      %c0_23 = arith.constant 0 : index
      %35 = vector.load %arg10[%c0_22, %c0_23] : memref<2x32xf32, #tpu.memory_space<vmem>>, vector<2x32xf32>
      tpu.vector_store %arg10[%c0_22, %c0_23], %34 {strides = array<i32>} : memref<2x32xf32, #tpu.memory_space<vmem>>, vector<2x32xf32>,
    } else {
    }
    %c3_i32 = arith.constant 3 : i32
    %12 = arith.cmpi eq, %arg1, %c3_i32 : i32
    %13 = arith.extui %12 : i1 to i32
    %c0_i32_5 = arith.constant 0 : i32
    %14 = arith.cmpi ne, %13, %c0_i32_5 : i32
    scf.if %14 {
      %c0 = arith.constant 0 : index
      %c0_6 = arith.constant 0 : index
      %15 = vector.load %arg10[%c0, %c0_6] : memref<2x32xf32, #tpu.memory_space<vmem>>, vector<2x32xf32>
      %c0_7 = arith.constant 0 : index
      %c0_8 = arith.constant 0 : index
      %16 = vector.load %arg9[%c0_7, %c0_8] : memref<2x32xf32, #tpu.memory_space<vmem>>, vector<2x32xf32>
      tpu.vector_store %arg9[%c0_7, %c0_8], %15 {strides = array<i32>} : memref<2x32xf32, #tpu.memory_space<vmem>>, vector<2x32xf32>,
    } else {
    }
    return
  }
  func.func @transform_0(%arg0: i32, %arg1: i32) -> (i32, i32) {
    %c1_i32 = arith.constant 1 : i32
    %0 = arith.minsi %arg1, %c1_i32 : i32
    %c0_i32 = arith.constant 0 : i32
    return %arg0, %0 : i32, i32
  }
  func.func @transform_1(%arg0: i32, %arg1: i32) -> (i32, i32) {
    %c1_i32 = arith.constant 1 : i32
    %0 = arith.minsi %arg1, %c1_i32 : i32
    %c0_i32 = arith.constant 0 : i32
    %c0_i32_0 = arith.constant 0 : i32
    return %0, %c0_i32 : i32, i32
  }
  func.func @transform_2(%arg0: i32, %arg1: i32) -> (i32, i32) {
    %c0_i32 = arith.constant 0 : i32
    %c0_i32_0 = arith.constant 0 : i32
    %c0_i32_1 = arith.constant 0 : i32
    return %c0_i32, %c0_i32_0 : i32, i32
  }
  func.func @transform_3(%arg0: i32, %arg1: i32) -> (i32, i32, i32) {
    %c2_i32 = arith.constant 2 : i32
    %0 = arith.subi %arg1, %c2_i32 : i32
    %c0_i32 = arith.constant 0 : i32
    %1 = arith.maxsi %0, %c0_i32 : i32
    %c0_i32_0 = arith.constant 0 : i32
    %c0_i32_1 = arith.constant 0 : i32
    %c0_i32_2 = arith.constant 0 : i32
    return %1, %c0_i32_0, %c0_i32_1 : i32, i32, i32
  }
  func.func @transform_4(%arg0: i32, %arg1: i32) -> (i32, i32, i32) {
    %c2_i32 = arith.constant 2 : i32
    %0 = arith.subi %arg1, %c2_i32 : i32
    %c0_i32 = arith.constant 0 : i32
    %1 = arith.maxsi %0, %c0_i32 : i32
    %c0_i32_0 = arith.constant 0 : i32
    %c0_i32_1 = arith.constant 0 : i32
    %c0_i32_2 = arith.constant 0 : i32
    return %1, %c0_i32_0, %c0_i32_1 : i32, i32, i32
  }
  func.func @transform_5(%arg0: i32, %arg1: i32) -> (i32, i32, i32) {
    %c2_i32 = arith.constant 2 : i32
    %0 = arith.subi %arg1, %c2_i32 : i32
    %c0_i32 = arith.constant 0 : i32
    %1 = arith.maxsi %0, %c0_i32 : i32
    %c0_i32_0 = arith.constant 0 : i32
    %c0_i32_1 = arith.constant 0 : i32
    %c0_i32_2 = arith.constant 0 : i32
    return %1, %c0_i32_0, %c0_i32_1 : i32, i32, i32
  }
  func.func @transform_6(%arg0: i32, %arg1: i32) -> (i32, i32, i32) {
    %c2_i32 = arith.constant 2 : i32
    %0 = arith.subi %arg1, %c2_i32 : i32
    %c0_i32 = arith.constant 0 : i32
    %1 = arith.maxsi %0, %c0_i32 : i32
    %c0_i32_0 = arith.constant 0 : i32
    %c0_i32_1 = arith.constant 0 : i32
    %c0_i32_2 = arith.constant 0 : i32
    return %1, %c0_i32_0, %c0_i32_1 : i32, i32, i32
  }
  func.func @transform_7(%arg0: i32, %arg1: i32) -> (i32, i32) {
    %c0_i32 = arith.constant 0 : i32
    %c0_i32_0 = arith.constant 0 : i32
    return %arg0, %c0_i32 : i32, i32
  }
}

</mosaic_0001>

<llo_original>
// kernel: tpu_custom_call.1
$region0: #{tpu_custom_call.1}
  #allocation0 [shape = 'u32[]', space=smem, size = 0x4, offset = 0x4, fixed_abs, tag = 'smem constant byte address 0x4 - core index']
  #allocation1 [shape = 'u32[72,128]{1,0:T(1,128)}', space=vmem, size = 0x9000, scoped, tag = 'internal scratch']
  #allocation2 [shape = 'f32[2,32]{1,0:T(2,128)}', space=vmem, size = 0x400, scoped, tag = 'scratch operand']
  %s0 = inlined_call_operand.vmem [shape: f32[2,1024], index: 0, kind: input, shape index: {}]
  %s1 = inlined_call_operand.vmem [shape: f32[1024,32], index: 1, kind: input, shape index: {}]
  %s2 = inlined_call_operand.vmem [shape: f32[1,32], index: 2, kind: input, shape index: {}]
  %s3 = inlined_call_operand.vmem [shape: f32[2,32,32], index: 3, kind: input, shape index: {}]
  %s4 = inlined_call_operand.vmem [shape: f32[2,1,32], index: 4, kind: input, shape index: {}]
  %s5 = inlined_call_operand.vmem [shape: f32[2,32,32], index: 5, kind: input, shape index: {}]
  %s6 = inlined_call_operand.vmem [shape: f32[2,1,32], index: 6, kind: input, shape index: {}]
  %s7 = inlined_call_operand.hbm [shape: f32[2,32], index: 7, kind: output, shape index: {}]
  %s8 = sld [smem:[#allocation0]]
  $region81: #{tpu_custom_call.1} parent=0
    _
  %s10 = ssub.s32 1, %s8
  %s11 = scalar_select 0, %s10, %s8
  $region1: #{tpu_custom_call.1} parent=0
    #allocation3 [shape = 'u8[1024]{0}', space=vmem, size = 0x400, scoped, tag = 'output window, operand 0, single buffered']
    #allocation4 [shape = 's32[2]{0}', space=sflag, size = 0x8, scoped, tag = 'scoped memory for tpu_custom_call.1']
    %12 = vsyncpa [#allocation4], 0
    loop: start=0, step=1, limit=6
    $region2: #{tpu_custom_call.1} parent=1 // loop_pre_header
      _
    $region3: #{tpu_custom_call.1} parent=1 // loop_header
      %s14 = sphi 0, %s18
      %p15 = scmp.ge.s32.totalorder %s14, 6
      %s21 = sphi 0, %s33
      %s22 = sphi 0, %s29
      %s23 = sphi 0, %s21
      %s24 = sphi 0, %s22
      %s25 = sphi 0, %s23
      %s26 = sphi 0, %s24
      %s42 = sphi 0, %s44
      %s45 = sphi 0, %s42
      %s46 = sphi 0, %s45
      %s62 = sphi 0, %s46
      %s72 = sphi 0, %s74
      %s75 = sphi 0, %s72
      %s76 = sphi 0, %s75
      %s92 = sphi 0, %s76
      %s96 = sphi 0, %s96
      %s98 = sphi 0, %s96
      %s99 = sphi 0, %s98
      %s113 = sphi 0, %s99
      %s125 = sphi 0, %s127
      %s128 = sphi 0, %s125
      %s129 = sphi 0, %s128
      %s145 = sphi 0, %s129
      %s157 = sphi 0, %s159
      %s160 = sphi 0, %s157
      %s161 = sphi 0, %s160
      %s177 = sphi 0, %s161
      %s189 = sphi 0, %s191
      %s192 = sphi 0, %s189
      %s193 = sphi 0, %s192
      %s209 = sphi 0, %s193
      %s221 = sphi 0, %s223
      %s224 = sphi 0, %s221
      %s225 = sphi 0, %s224
      %s241 = sphi 0, %s225
      %s247 = sphi 0, %s249
      %s250 = sphi 0, %s247
      %s251 = sphi 0, %s250
      %s267 = sphi 0, %s251
    $region4: #{tpu_custom_call.1} parent=1 // loop_header_branch
      %17 = sbr.rel (%p15) target = $region8
    $region5: #{tpu_custom_call.1} parent=1 // loop_body
      %s19 = ssub.s32 %s14, 1
      %s20 = ssub.s32 %s14, 2
      %s27 = sadd.s32 1, %s22
      %p28 = scmp.ge.s32.totalorder %s27, 4
      %s29 = scalar_select %p28, 0, %s27
      %s30 = sadd.s32 1, %s21
      %s31 = scalar_select %p28, %s30, %s21
      %p32 = scmp.ge.s32.totalorder %s31, 1
      %s33 = scalar_select %p32, 0, %s31
      %p34 = scmp.lt.s32.totalorder %s22, 1
      %s35 = scalar_select %p34, %s22, 1
      %p36 = scmp.lt.s32.totalorder %s29, 1
      %s37 = scalar_select %p36, %s29, 1
      %s38 = ssub.s32 %s21, %s33
      %s39 = ssub.s32 %s35, %s37
      %s40 = sor.u32 %s38, %s39
      %p41 = scmp.eq.s32.totalorder %s40, 0
      %s43 = sadd.s32 %s42, 1
      %s44 = scalar_select %p41, %s42, %s43
      %p47 = pneg %p41
      %p48 = scmp.eq.s32.totalorder %s14, 3
      %p49 = por %p47, %p48
      %p50 = scmp.ne.s32.totalorder %s42, %s45
      %p51 = scmp.eq.s32.totalorder %s14, 0
      %p52 = por %p50, %p51
      %p53 = scmp.ne.s32.totalorder %s42, %s45
      %p54 = scmp.eq.s32.totalorder %s19, 3
      %p55 = por %p53, %p54
      %p56 = scmp.ne.s32.totalorder %s45, %s46
      %p57 = scmp.eq.s32.totalorder %s19, 0
      %p58 = por %p56, %p57
      %p59 = scmp.ne.s32.totalorder %s45, %s46
      %p60 = scmp.eq.s32.totalorder %s20, 3
      %p61 = por %p59, %p60
      %p63 = scmp.ne.s32.totalorder %s46, %s62
      %p64 = scmp.eq.s32.totalorder %s20, 0
      %p65 = por %p63, %p64
      %p66 = scmp.lt.s32.totalorder %s22, 1
      %s67 = scalar_select %p66, %s22, 1
      %p68 = scmp.lt.s32.totalorder %s29, 1
      %s69 = scalar_select %p68, %s29, 1
      %s70 = ssub.s32 %s67, %s69
      %p71 = scmp.eq.s32.totalorder %s70, 0
      %s73 = sadd.s32 %s72, 1
      %s74 = scalar_select %p71, %s72, %s73
      %p77 = pneg %p71
      %p78 = scmp.eq.s32.totalorder %s14, 3
      %p79 = por %p77, %p78
      %p80 = scmp.ne.s32.totalorder %s72, %s75
      %p81 = scmp.eq.s32.totalorder %s14, 0
      %p82 = por %p80, %p81
      %p83 = scmp.ne.s32.totalorder %s72, %s75
      %p84 = scmp.eq.s32.totalorder %s19, 3
      %p85 = por %p83, %p84
      %p86 = scmp.ne.s32.totalorder %s75, %s76
      %p87 = scmp.eq.s32.totalorder %s19, 0
      %p88 = por %p86, %p87
      %p89 = scmp.ne.s32.totalorder %s75, %s76
      %p90 = scmp.eq.s32.totalorder %s20, 3
      %p91 = por %p89, %p90
      %p93 = scmp.ne.s32.totalorder %s76, %s92
      %p94 = scmp.eq.s32.totalorder %s20, 0
      %p95 = por %p93, %p94
      %s97 = sadd.s32 %s96, 1
      %p100 = scmp.eq.s32.totalorder %s14, 3
      %p101 = scmp.ne.s32.totalorder %s96, %s98
      %p102 = scmp.eq.s32.totalorder %s14, 0
      %p103 = por %p101, %p102
      %p104 = scmp.ne.s32.totalorder %s96, %s98
      %p105 = scmp.eq.s32.totalorder %s19, 3
      %p106 = por %p104, %p105
      %p107 = scmp.ne.s32.totalorder %s98, %s99
      %p108 = scmp.eq.s32.totalorder %s19, 0
      %p109 = por %p107, %p108
      %p110 = scmp.ne.s32.totalorder %s98, %s99
      %p111 = scmp.eq.s32.totalorder %s20, 3
      %p112 = por %p110, %p111
      %p114 = scmp.ne.s32.totalorder %s99, %s113
      %p115 = scmp.eq.s32.totalorder %s20, 0
      %p116 = por %p114, %p115
      %s117 = ssub.s32 %s22, 2
      %p118 = scmp.gt.s32.totalorder %s117, 0
      %s119 = scalar_select %p118, %s117, 0
      %s120 = ssub.s32 %s29, 2
      %p121 = scmp.gt.s32.totalorder %s120, 0
      %s122 = scalar_select %p121, %s120, 0
      %s123 = ssub.s32 %s119, %s122
      %p124 = scmp.eq.s32.totalorder %s123, 0
      %s126 = sadd.s32 %s125, 1
      %s127 = scalar_select %p124, %s125, %s126
      %p130 = pneg %p124
      %p131 = scmp.eq.s32.totalorder %s14, 3
      %p132 = por %p130, %p131
      %p133 = scmp.ne.s32.totalorder %s125, %s128
      %p134 = scmp.eq.s32.totalorder %s14, 0
      %p135 = por %p133, %p134
      %p136 = scmp.ne.s32.totalorder %s125, %s128
      %p137 = scmp.eq.s32.totalorder %s19, 3
      %p138 = por %p136, %p137
      %p139 = scmp.ne.s32.totalorder %s128, %s129
      %p140 = scmp.eq.s32.totalorder %s19, 0
      %p141 = por %p139, %p140
      %p142 = scmp.ne.s32.totalorder %s128, %s129
      %p143 = scmp.eq.s32.totalorder %s20, 3
      %p144 = por %p142, %p143
      %p146 = scmp.ne.s32.totalorder %s129, %s145
      %p147 = scmp.eq.s32.totalorder %s20, 0
      %p148 = por %p146, %p147
      %s149 = ssub.s32 %s22, 2
      %p150 = scmp.gt.s32.totalorder %s149, 0
      %s151 = scalar_select %p150, %s149, 0
      %s152 = ssub.s32 %s29, 2
      %p153 = scmp.gt.s32.totalorder %s152, 0
      %s154 = scalar_select %p153, %s152, 0
      %s155 = ssub.s32 %s151, %s154
      %p156 = scmp.eq.s32.totalorder %s155, 0
      %s158 = sadd.s32 %s157, 1
      %s159 = scalar_select %p156, %s157, %s158
      %p162 = pneg %p156
      %p163 = scmp.eq.s32.totalorder %s14, 3
      %p164 = por %p162, %p163
      %p165 = scmp.ne.s32.totalorder %s157, %s160
      %p166 = scmp.eq.s32.totalorder %s14, 0
      %p167 = por %p165, %p166
      %p168 = scmp.ne.s32.totalorder %s157, %s160
      %p169 = scmp.eq.s32.totalorder %s19, 3
      %p170 = por %p168, %p169
      %p171 = scmp.ne.s32.totalorder %s160, %s161
      %p172 = scmp.eq.s32.totalorder %s19, 0
      %p173 = por %p171, %p172
      %p174 = scmp.ne.s32.totalorder %s160, %s161
      %p175 = scmp.eq.s32.totalorder %s20, 3
      %p176 = por %p174, %p175
      %p178 = scmp.ne.s32.totalorder %s161, %s177
      %p179 = scmp.eq.s32.totalorder %s20, 0
      %p180 = por %p178, %p179
      %s181 = ssub.s32 %s22, 2
      %p182 = scmp.gt.s32.totalorder %s181, 0
      %s183 = scalar_select %p182, %s181, 0
      %s184 = ssub.s32 %s29, 2
      %p185 = scmp.gt.s32.totalorder %s184, 0
      %s186 = scalar_select %p185, %s184, 0
      %s187 = ssub.s32 %s183, %s186
      %p188 = scmp.eq.s32.totalorder %s187, 0
      %s190 = sadd.s32 %s189, 1
      %s191 = scalar_select %p188, %s189, %s190
      %p194 = pneg %p188
      %p195 = scmp.eq.s32.totalorder %s14, 3
      %p196 = por %p194, %p195
      %p197 = scmp.ne.s32.totalorder %s189, %s192
      %p198 = scmp.eq.s32.totalorder %s14, 0
      %p199 = por %p197, %p198
      %p200 = scmp.ne.s32.totalorder %s189, %s192
      %p201 = scmp.eq.s32.totalorder %s19, 3
      %p202 = por %p200, %p201
      %p203 = scmp.ne.s32.totalorder %s192, %s193
      %p204 = scmp.eq.s32.totalorder %s19, 0
      %p205 = por %p203, %p204
      %p206 = scmp.ne.s32.totalorder %s192, %s193
      %p207 = scmp.eq.s32.totalorder %s20, 3
      %p208 = por %p206, %p207
      %p210 = scmp.ne.s32.totalorder %s193, %s209
      %p211 = scmp.eq.s32.totalorder %s20, 0
      %p212 = por %p210, %p211
      %s213 = ssub.s32 %s22, 2
      %p214 = scmp.gt.s32.totalorder %s213, 0
      %s215 = scalar_select %p214, %s213, 0
      %s216 = ssub.s32 %s29, 2
      %p217 = scmp.gt.s32.totalorder %s216, 0
      %s218 = scalar_select %p217, %s216, 0
      %s219 = ssub.s32 %s215, %s218
      %p220 = scmp.eq.s32.totalorder %s219, 0
      %s222 = sadd.s32 %s221, 1
      %s223 = scalar_select %p220, %s221, %s222
      %p226 = pneg %p220
      %p227 = scmp.eq.s32.totalorder %s14, 3
      %p228 = por %p226, %p227
      %p229 = scmp.ne.s32.totalorder %s221, %s224
      %p230 = scmp.eq.s32.totalorder %s14, 0
      %p231 = por %p229, %p230
      %p232 = scmp.ne.s32.totalorder %s221, %s224
      %p233 = scmp.eq.s32.totalorder %s19, 3
      %p234 = por %p232, %p233
      %p235 = scmp.ne.s32.totalorder %s224, %s225
      %p236 = scmp.eq.s32.totalorder %s19, 0
      %p237 = por %p235, %p236
      %p238 = scmp.ne.s32.totalorder %s224, %s225
      %p239 = scmp.eq.s32.totalorder %s20, 3
      %p240 = por %p238, %p239
      %p242 = scmp.ne.s32.totalorder %s225, %s241
      %p243 = scmp.eq.s32.totalorder %s20, 0
      %p244 = por %p242, %p243
      %s245 = ssub.s32 %s21, %s33
      %p246 = scmp.eq.s32.totalorder %s245, 0
      %s248 = sadd.s32 %s247, 1
      %s249 = scalar_select %p246, %s247, %s248
      %p252 = pneg %p246
      %p253 = scmp.eq.s32.totalorder %s14, 3
      %p254 = por %p252, %p253
      %p255 = scmp.ne.s32.totalorder %s247, %s250
      %p256 = scmp.eq.s32.totalorder %s14, 0
      %p257 = por %p255, %p256
      %p258 = scmp.ne.s32.totalorder %s247, %s250
      %p259 = scmp.eq.s32.totalorder %s19, 3
      %p260 = por %p258, %p259
      %p261 = scmp.ne.s32.totalorder %s250, %s251
      %p262 = scmp.eq.s32.totalorder %s19, 0
      %p263 = por %p261, %p262
      %p264 = scmp.ne.s32.totalorder %s250, %s251
      %p265 = scmp.eq.s32.totalorder %s20, 3
      %p266 = por %p264, %p265
      %p268 = scmp.ne.s32.totalorder %s251, %s267
      %p269 = scmp.eq.s32.totalorder %s20, 0
      %p270 = por %p268, %p269
      %p271 = scmp.le.s32.totalorder 1, %s14
      %p272 = scmp.lt.s32.totalorder %s14, 5
      %p273 = pnand %p271, %p272
      %p274 = pneg %p273
      // Predicated region
      $region9: #{tpu_custom_call.1} parent=5 // pred_check
        _
      $region10: #{tpu_custom_call.1} parent=5 // pred_check_branch
        %276 = sbr.rel (%p273) target = $region12
      $region11: #{tpu_custom_call.1} parent=5 // pred_region
        %s277 = ssub.s32 %s14, 1
        // Predicated region
        $region13: #{tpu_custom_call.1} parent=11 // pred_check
          %p278 = pneg %p109
        $region14: #{tpu_custom_call.1} parent=11 // pred_check_branch
          %280 = sbr.rel (%p278) target = $region16
        $region15: #{tpu_custom_call.1} parent=11 // pred_region
          _
        $region16: #{tpu_custom_call.1} parent=11 // pred_fallthru
          _
      $region12: #{tpu_custom_call.1} parent=5 // pred_fallthru
        _
      %p281 = scmp.lt.s32.totalorder %s14, 4
      // Predicated region
      $region17: #{tpu_custom_call.1} parent=5 // pred_check
        %p282 = pneg %p281
      $region18: #{tpu_custom_call.1} parent=5 // pred_check_branch
        %284 = sbr.rel (%p282) target = $region20
      $region19: #{tpu_custom_call.1} parent=5 // pred_region
        // Predicated region
        $region21: #{tpu_custom_call.1} parent=19 // pred_check
          %p285 = pneg %p52
        $region22: #{tpu_custom_call.1} parent=19 // pred_check_branch
          %287 = sbr.rel (%p285) target = $region24
        $region23: #{tpu_custom_call.1} parent=19 // pred_region
          %p288 = scmp.lt.s32.totalorder %s22, 1
          %s289 = scalar_select %p288, %s22, 1
          %s290 = smul.u32 4, %s289
          %p291 = scmp.lt.s32.totalorder %s21, 0
          %s292 = scalar_select %p291, %s21, 0
          %p293 = scmp.lt.s32.totalorder %s290, 7
          %s294 = scalar_select %p293, %s290, 7
          %s295 = smul.addr %s292, 8
          %s296 = sadd.s32 %s294, %s295
          %s297 = smul.addr %s296, 2
          %s298 = scalar_lea.vmem %s0, %s297
          %p299 = scmp.lt.s32.totalorder %s22, 1
          %s300 = scalar_select %p299, %s22, 1
          %s301 = smul.u32 4, %s300
        $region24: #{tpu_custom_call.1} parent=19 // pred_fallthru
          _
        // Predicated region
        $region25: #{tpu_custom_call.1} parent=19 // pred_check
          %p302 = pneg %p82
        $region26: #{tpu_custom_call.1} parent=19 // pred_check_branch
          %304 = sbr.rel (%p302) target = $region28
        $region27: #{tpu_custom_call.1} parent=19 // pred_region
          %p305 = scmp.lt.s32.totalorder %s22, 1
          %s306 = scalar_select %p305, %s22, 1
          %s307 = smul.u32 64, %s306
          %p308 = scmp.lt.s32.totalorder %s307, 127
          %s309 = scalar_select %p308, %s307, 127
          %s310 = smul.addr %s309, 8
          %s311 = scalar_lea.vmem %s1, %s310
          %p312 = scmp.lt.s32.totalorder %s22, 1
          %s313 = scalar_select %p312, %s22, 1
          %s314 = smul.u32 64, %s313
        $region28: #{tpu_custom_call.1} parent=19 // pred_fallthru
          _
        // Predicated region
        $region29: #{tpu_custom_call.1} parent=19 // pred_check
          %p315 = pneg %p135
        $region30: #{tpu_custom_call.1} parent=19 // pred_check_branch
          %317 = sbr.rel (%p315) target = $region32
        $region31: #{tpu_custom_call.1} parent=19 // pred_region
          %s318 = ssub.s32 %s22, 2
          %p319 = scmp.gt.s32.totalorder %s318, 0
          %s320 = scalar_select %p319, %s318, 0
          %p321 = scmp.lt.s32.totalorder %s320, 1
          %s322 = scalar_select %p321, %s320, 1
          %s323 = smul.addr %s322, 4
          %s324 = smul.addr %s323, 8
          %s325 = scalar_lea.vmem %s3, %s324
          %s326 = ssub.s32 %s22, 2
          %p327 = scmp.gt.s32.totalorder %s326, 0
          %s328 = scalar_select %p327, %s326, 0
        $region32: #{tpu_custom_call.1} parent=19 // pred_fallthru
          _
        // Predicated region
        $region33: #{tpu_custom_call.1} parent=19 // pred_check
          %p329 = pneg %p167
        $region34: #{tpu_custom_call.1} parent=19 // pred_check_branch
          %331 = sbr.rel (%p329) target = $region36
        $region35: #{tpu_custom_call.1} parent=19 // pred_region
          %s332 = ssub.s32 %s22, 2
          %p333 = scmp.gt.s32.totalorder %s332, 0
          %s334 = scalar_select %p333, %s332, 0
          %p335 = scmp.lt.s32.totalorder %s334, 1
          %s336 = scalar_select %p335, %s334, 1
          %s337 = scalar_lea.vmem %s4, %s336
          %s338 = ssub.s32 %s22, 2
          %p339 = scmp.gt.s32.totalorder %s338, 0
          %s340 = scalar_select %p339, %s338, 0
        $region36: #{tpu_custom_call.1} parent=19 // pred_fallthru
          _
        // Predicated region
        $region37: #{tpu_custom_call.1} parent=19 // pred_check
          %p341 = pneg %p199
        $region38: #{tpu_custom_call.1} parent=19 // pred_check_branch
          %343 = sbr.rel (%p341) target = $region40
        $region39: #{tpu_custom_call.1} parent=19 // pred_region
          %s344 = ssub.s32 %s22, 2
          %p345 = scmp.gt.s32.totalorder %s344, 0
          %s346 = scalar_select %p345, %s344, 0
          %p347 = scmp.lt.s32.totalorder %s346, 1
          %s348 = scalar_select %p347, %s346, 1
          %s349 = smul.addr %s348, 4
          %s350 = smul.addr %s349, 8
          %s351 = scalar_lea.vmem %s5, %s350
          %s352 = ssub.s32 %s22, 2
          %p353 = scmp.gt.s32.totalorder %s352, 0
          %s354 = scalar_select %p353, %s352, 0
        $region40: #{tpu_custom_call.1} parent=19 // pred_fallthru
          _
        // Predicated region
        $region41: #{tpu_custom_call.1} parent=19 // pred_check
          %p355 = pneg %p231
        $region42: #{tpu_custom_call.1} parent=19 // pred_check_branch
          %357 = sbr.rel (%p355) target = $region44
        $region43: #{tpu_custom_call.1} parent=19 // pred_region
          %s358 = ssub.s32 %s22, 2
          %p359 = scmp.gt.s32.totalorder %s358, 0
          %s360 = scalar_select %p359, %s358, 0
          %p361 = scmp.lt.s32.totalorder %s360, 1
          %s362 = scalar_select %p361, %s360, 1
          %s363 = scalar_lea.vmem %s6, %s362
          %s364 = ssub.s32 %s22, 2
          %p365 = scmp.gt.s32.totalorder %s364, 0
          %s366 = scalar_select %p365, %s364, 0
        $region44: #{tpu_custom_call.1} parent=19 // pred_fallthru
          _
      $region20: #{tpu_custom_call.1} parent=5 // pred_fallthru
        _
      %p367 = scmp.le.s32.totalorder 1, %s14
      %p368 = scmp.lt.s32.totalorder %s14, 5
      %p369 = pnand %p367, %p368
      %p370 = pneg %p369
      // Predicated region
      $region45: #{tpu_custom_call.1} parent=5 // pred_check
        _
      $region46: #{tpu_custom_call.1} parent=5 // pred_check_branch
        %372 = sbr.rel (%p369) target = $region48
      $region47: #{tpu_custom_call.1} parent=5 // pred_region
        %s373 = ssub.s32 %s14, 1
        %p374 = scmp.lt.s32.totalorder %s24, 1
        %s375 = scalar_select %p374, %s24, 1
        %s376 = smul.u32 4, %s375
        %p377 = scmp.lt.s32.totalorder %s23, 0
        %s378 = scalar_select %p377, %s23, 0
        %p379 = scmp.lt.s32.totalorder %s376, 7
        %s380 = scalar_select %p379, %s376, 7
        %s381 = smul.addr %s378, 8
        %s382 = sadd.s32 %s380, %s381
        %s383 = smul.addr %s382, 2
        %s384 = scalar_lea.vmem %s0, %s383
        %p385 = pneg %p58
        %p386 = pneg %p55
        %p387 = scmp.lt.s32.totalorder %s24, 1
        %s388 = scalar_select %p387, %s24, 1
        %s389 = smul.u32 64, %s388
        %p390 = scmp.lt.s32.totalorder %s389, 127
        %s391 = scalar_select %p390, %s389, 127
        %s392 = smul.addr %s391, 8
        %s393 = scalar_lea.vmem %s1, %s392
        %p394 = pneg %p88
        %p395 = pneg %p85
        %p396 = pneg %p109
        %p397 = pneg %p106
        %s398 = ssub.s32 %s24, 2
        %p399 = scmp.gt.s32.totalorder %s398, 0
        %s400 = scalar_select %p399, %s398, 0
        %p401 = scmp.lt.s32.totalorder %s400, 1
        %s402 = scalar_select %p401, %s400, 1
        %s403 = smul.addr %s402, 4
        %s404 = smul.addr %s403, 8
        %s405 = scalar_lea.vmem %s3, %s404
        %p406 = pneg %p141
        %p407 = pneg %p138
        %s408 = ssub.s32 %s24, 2
        %p409 = scmp.gt.s32.totalorder %s408, 0
        %s410 = scalar_select %p409, %s408, 0
        %p411 = scmp.lt.s32.totalorder %s410, 1
        %s412 = scalar_select %p411, %s410, 1
        %s413 = scalar_lea.vmem %s4, %s412
        %p414 = pneg %p173
        %p415 = pneg %p170
        %s416 = ssub.s32 %s24, 2
        %p417 = scmp.gt.s32.totalorder %s416, 0
        %s418 = scalar_select %p417, %s416, 0
        %p419 = scmp.lt.s32.totalorder %s418, 1
        %s420 = scalar_select %p419, %s418, 1
        %s421 = smul.addr %s420, 4
        %s422 = smul.addr %s421, 8
        %s423 = scalar_lea.vmem %s5, %s422
        %p424 = pneg %p205
        %p425 = pneg %p202
        %s426 = ssub.s32 %s24, 2
        %p427 = scmp.gt.s32.totalorder %s426, 0
        %s428 = scalar_select %p427, %s426, 0
        %p429 = scmp.lt.s32.totalorder %s428, 1
        %s430 = scalar_select %p429, %s428, 1
        %s431 = scalar_lea.vmem %s6, %s430
        %p432 = pneg %p237
        %p433 = pneg %p234
        %p434 = pneg %p263
        %p435 = pneg %p260
        %p436 = scmp.lt.s32.totalorder %s24, 1
        %s437 = scalar_select %p436, %s24, 1
        %s438 = smul.u32 4, %s437
        %p439 = scmp.lt.s32.totalorder %s23, 0
        %s440 = scalar_select %p439, %s23, 0
        %p441 = scmp.lt.s32.totalorder %s438, 7
        %s442 = scalar_select %p441, %s438, 7
        %s443 = smul.addr %s440, 8
        %s444 = sadd.s32 %s442, %s443
        %s445 = smul.addr %s444, 2
        %s446 = scalar_lea.vmem %s0, %s445
        %p447 = scmp.lt.s32.totalorder %s24, 1
        %s448 = scalar_select %p447, %s24, 1
        %s449 = smul.u32 4, %s448
        %p450 = scmp.lt.s32.totalorder %s24, 1
        %s451 = scalar_select %p450, %s24, 1
        %s452 = smul.u32 64, %s451
        %p453 = scmp.lt.s32.totalorder %s452, 127
        %s454 = scalar_select %p453, %s452, 127
        %s455 = smul.addr %s454, 8
        %s456 = scalar_lea.vmem %s1, %s455
        %p457 = scmp.lt.s32.totalorder %s24, 1
        %s458 = scalar_select %p457, %s24, 1
        %s459 = smul.u32 64, %s458
        %s460 = ssub.s32 %s24, 2
        %p461 = scmp.gt.s32.totalorder %s460, 0
        %s462 = scalar_select %p461, %s460, 0
        %p463 = scmp.lt.s32.totalorder %s462, 1
        %s464 = scalar_select %p463, %s462, 1
        %s465 = smul.addr %s464, 4
        %s466 = smul.addr %s465, 8
        %s467 = scalar_lea.vmem %s3, %s466
        %s468 = ssub.s32 %s24, 2
        %p469 = scmp.gt.s32.totalorder %s468, 0
        %s470 = scalar_select %p469, %s468, 0
        %s471 = ssub.s32 %s24, 2
        %p472 = scmp.gt.s32.totalorder %s471, 0
        %s473 = scalar_select %p472, %s471, 0
        %p474 = scmp.lt.s32.totalorder %s473, 1
        %s475 = scalar_select %p474, %s473, 1
        %s476 = scalar_lea.vmem %s4, %s475
        %s477 = ssub.s32 %s24, 2
        %p478 = scmp.gt.s32.totalorder %s477, 0
        %s479 = scalar_select %p478, %s477, 0
        %s480 = ssub.s32 %s24, 2
        %p481 = scmp.gt.s32.totalorder %s480, 0
        %s482 = scalar_select %p481, %s480, 0
        %p483 = scmp.lt.s32.totalorder %s482, 1
        %s484 = scalar_select %p483, %s482, 1
        %s485 = smul.addr %s484, 4
        %s486 = smul.addr %s485, 8
        %s487 = scalar_lea.vmem %s5, %s486
        %s488 = ssub.s32 %s24, 2
        %p489 = scmp.gt.s32.totalorder %s488, 0
        %s490 = scalar_select %p489, %s488, 0
        %s491 = ssub.s32 %s24, 2
        %p492 = scmp.gt.s32.totalorder %s491, 0
        %s493 = scalar_select %p492, %s491, 0
        %p494 = scmp.lt.s32.totalorder %s493, 1
        %s495 = scalar_select %p494, %s493, 1
        %s496 = scalar_lea.vmem %s6, %s495
        %s497 = ssub.s32 %s24, 2
        %p498 = scmp.gt.s32.totalorder %s497, 0
        %s499 = scalar_select %p498, %s497, 0
        %p500 = scmp.eq.s32.totalorder %s24, 0
        // Predicated region
        $region49: #{tpu_custom_call.1} parent=47 // pred_check
          %p501 = pneg %p500
        $region50: #{tpu_custom_call.1} parent=47 // pred_check_branch
          %503 = sbr.rel (%p501) target = $region52
        $region51: #{tpu_custom_call.1} parent=47 // pred_region
          %vm504 = vcmask 254976
          %505 = vst.msk [vmem:[#allocation2] sm:$0x3] %vm504, 0.0
        $region52: #{tpu_custom_call.1} parent=47 // pred_fallthru
          _
        %p506 = scmp.lt.s32.totalorder %s24, 2
        // Predicated region
        $region53: #{tpu_custom_call.1} parent=47 // pred_check
          %p507 = pneg %p506
        $region54: #{tpu_custom_call.1} parent=47 // pred_check_branch
          %509 = sbr.rel (%p507) target = $region56
        $region55: #{tpu_custom_call.1} parent=47 // pred_region
          %v510 = vld [vmem:[%s446] sm:$0xff]
          %v511 = vld [vmem:[#allocation2] sm:$0x3]
          %v512 = vld [vmem:[%s456] sm:$0xff]
          %v513 = vld [vmem:[%s456 + $0x8] sm:$0xff]
          %v514 = vld [vmem:[%s456 + $0x10] sm:$0xff]
          %v515 = vld [vmem:[%s456 + $0x18] sm:$0xff]
          %v516 = vld [vmem:[%s456 + $0x20] sm:$0xff]
          %v517 = vld [vmem:[%s456 + $0x28] sm:$0xff]
          %v518 = vld [vmem:[%s456 + $0x30] sm:$0xff]
          %v519 = vld [vmem:[%s456 + $0x38] sm:$0xff]
          %v520 = vld [vmem:[%s456 + $0x40] sm:$0xff]
          %v521 = vld [vmem:[%s456 + $0x48] sm:$0xff]
          %v522 = vld [vmem:[%s456 + $0x50] sm:$0xff]
          %v523 = vld [vmem:[%s456 + $0x58] sm:$0xff]
          %v524 = vld [vmem:[%s456 + $0x60] sm:$0xff]
          %v525 = vld [vmem:[%s456 + $0x68] sm:$0xff]
          %v526 = vld [vmem:[%s456 + $0x70] sm:$0xff]
          %v527 = vld [vmem:[%s456 + $0x78] sm:$0xff]
          %v528 = vld [vmem:[%s456 + $0x80] sm:$0xff]
          %v529 = vld [vmem:[%s456 + $0x88] sm:$0xff]
          %v530 = vld [vmem:[%s456 + $0x90] sm:$0xff]
          %v531 = vld [vmem:[%s456 + $0x98] sm:$0xff]
          %v532 = vld [vmem:[%s456 + $0xa0] sm:$0xff]
          %v533 = vld [vmem:[%s456 + $0xa8] sm:$0xff]
          %v534 = vld [vmem:[%s456 + $0xb0] sm:$0xff]
          %v535 = vld [vmem:[%s456 + $0xb8] sm:$0xff]
          %v536 = vld [vmem:[%s456 + $0xc0] sm:$0xff]
          %v537 = vld [vmem:[%s456 + $0xc8] sm:$0xff]
          %v538 = vld [vmem:[%s456 + $0xd0] sm:$0xff]
          %v539 = vld [vmem:[%s456 + $0xd8] sm:$0xff]
          %v540 = vld [vmem:[%s456 + $0xe0] sm:$0xff]
          %v541 = vld [vmem:[%s456 + $0xe8] sm:$0xff]
          %v542 = vld [vmem:[%s456 + $0xf0] sm:$0xff]
          %v543 = vld [vmem:[%s456 + $0xf8] sm:$0xff]
          %v544 = vld [vmem:[%s456 + $0x100] sm:$0xff]
          %v545 = vld [vmem:[%s456 + $0x108] sm:$0xff]
          %v546 = vld [vmem:[%s456 + $0x110] sm:$0xff]
          %v547 = vld [vmem:[%s456 + $0x118] sm:$0xff]
          %v548 = vld [vmem:[%s456 + $0x120] sm:$0xff]
          %v549 = vld [vmem:[%s456 + $0x128] sm:$0xff]
          %v550 = vld [vmem:[%s456 + $0x130] sm:$0xff]
          %v551 = vld [vmem:[%s456 + $0x138] sm:$0xff]
          %v552 = vld [vmem:[%s456 + $0x140] sm:$0xff]
          %v553 = vld [vmem:[%s456 + $0x148] sm:$0xff]
          %v554 = vld [vmem:[%s456 + $0x150] sm:$0xff]
          %v555 = vld [vmem:[%s456 + $0x158] sm:$0xff]
          %v556 = vld [vmem:[%s456 + $0x160] sm:$0xff]
          %v557 = vld [vmem:[%s456 + $0x168] sm:$0xff]
          %v558 = vld [vmem:[%s456 + $0x170] sm:$0xff]
          %v559 = vld [vmem:[%s456 + $0x178] sm:$0xff]
          %v560 = vld [vmem:[%s456 + $0x180] sm:$0xff]
          %v561 = vld [vmem:[%s456 + $0x188] sm:$0xff]
          %v562 = vld [vmem:[%s456 + $0x190] sm:$0xff]
          %v563 = vld [vmem:[%s456 + $0x198] sm:$0xff]
          %v564 = vld [vmem:[%s456 + $0x1a0] sm:$0xff]
          %v565 = vld [vmem:[%s456 + $0x1a8] sm:$0xff]
          %v566 = vld [vmem:[%s456 + $0x1b0] sm:$0xff]
          %v567 = vld [vmem:[%s456 + $0x1b8] sm:$0xff]
          %v568 = vld [vmem:[%s456 + $0x1c0] sm:$0xff]
          %v569 = vld [vmem:[%s456 + $0x1c8] sm:$0xff]
          %v570 = vld [vmem:[%s456 + $0x1d0] sm:$0xff]
          %v571 = vld [vmem:[%s456 + $0x1d8] sm:$0xff]
          %v572 = vld [vmem:[%s456 + $0x1e0] sm:$0xff]
          %v573 = vld [vmem:[%s456 + $0x1e8] sm:$0xff]
          %v574 = vld [vmem:[%s456 + $0x1f0] sm:$0xff]
          %v575 = vld [vmem:[%s456 + $0x1f8] sm:$0xff]
          %577 = vst [vmem:[#allocation1] ss:$4 sm:$0xff] %v510
          %v578 = vld.sshfl [vmem:[#allocation1] sm:$0xff pattern:$0x73625140]
          %v579 = vld.sshfl [vmem:[#allocation1 + $0x8] sm:$0xff pattern:$0x73625140]
          %v580 = vld.sshfl [vmem:[#allocation1 + $0x10] sm:$0xff pattern:$0x73625140]
          %v581 = vld.sshfl [vmem:[#allocation1 + $0x18] sm:$0xff pattern:$0x73625140]
          %586 = vmatpush.msra.mxu0 %v527
          %587 = vmatpush.msra.mxu0 %v526
          %588 = vmatpush.msra.mxu0 %v525
          %589 = vmatpush.msra.mxu0 %v524
          %590 = vmatpush.msra.mxu0 %v523
          %591 = vmatpush.msra.mxu0 %v522
          %592 = vmatpush.msra.mxu0 %v521
          %593 = vmatpush.msra.mxu0 %v520
          %594 = vmatpush.msra.mxu0 %v519
          %595 = vmatpush.msra.mxu0 %v518
          %596 = vmatpush.msra.mxu0 %v517
          %597 = vmatpush.msra.mxu0 %v516
          %598 = vmatpush.msra.mxu0 %v515
          %599 = vmatpush.msra.mxu0 %v514
          %600 = vmatpush.msra.mxu0 %v513
          %601 = vmatpush.msra.mxu0 %v512
          %602 = vmatmul.f32.gmra.mxu0 %v578
          %v603 = vpop.f32.mrf.mxu0
          %v604 = vadd.f32 0.0, %v603
          %605 = vdwg.mxu0
          %606 = vmatpush.msra.mxu0 %v543
          %607 = vmatpush.msra.mxu0 %v542
          %608 = vmatpush.msra.mxu0 %v541
          %609 = vmatpush.msra.mxu0 %v540
          %610 = vmatpush.msra.mxu0 %v539
          %611 = vmatpush.msra.mxu0 %v538
          %612 = vmatpush.msra.mxu0 %v537
          %613 = vmatpush.msra.mxu0 %v536
          %614 = vmatpush.msra.mxu0 %v535
          %615 = vmatpush.msra.mxu0 %v534
          %616 = vmatpush.msra.mxu0 %v533
          %617 = vmatpush.msra.mxu0 %v532
          %618 = vmatpush.msra.mxu0 %v531
          %619 = vmatpush.msra.mxu0 %v530
          %620 = vmatpush.msra.mxu0 %v529
          %621 = vmatpush.msra.mxu0 %v528
          %622 = vmatmul.f32.gmra.mxu0 %v579
          %v623 = vpop.f32.mrf.mxu0
          %v624 = vadd.f32 %v604, %v623
          %625 = vdwg.mxu0
          %626 = vmatpush.msra.mxu0 %v559
          %627 = vmatpush.msra.mxu0 %v558
          %628 = vmatpush.msra.mxu0 %v557
          %629 = vmatpush.msra.mxu0 %v556
          %630 = vmatpush.msra.mxu0 %v555
          %631 = vmatpush.msra.mxu0 %v554
          %632 = vmatpush.msra.mxu0 %v553
          %633 = vmatpush.msra.mxu0 %v552
          %634 = vmatpush.msra.mxu0 %v551
          %635 = vmatpush.msra.mxu0 %v550
          %636 = vmatpush.msra.mxu0 %v549
          %637 = vmatpush.msra.mxu0 %v548
          %638 = vmatpush.msra.mxu0 %v547
          %639 = vmatpush.msra.mxu0 %v546
          %640 = vmatpush.msra.mxu0 %v545
          %641 = vmatpush.msra.mxu0 %v544
          %642 = vmatmul.f32.gmra.mxu0 %v580
          %v643 = vpop.f32.mrf.mxu0
          %v644 = vadd.f32 %v624, %v643
          %645 = vdwg.mxu0
          %646 = vmatpush.msra.mxu0 %v575
          %647 = vmatpush.msra.mxu0 %v574
          %648 = vmatpush.msra.mxu0 %v573
          %649 = vmatpush.msra.mxu0 %v572
          %650 = vmatpush.msra.mxu0 %v571
          %651 = vmatpush.msra.mxu0 %v570
          %652 = vmatpush.msra.mxu0 %v569
          %653 = vmatpush.msra.mxu0 %v568
          %654 = vmatpush.msra.mxu0 %v567
          %655 = vmatpush.msra.mxu0 %v566
          %656 = vmatpush.msra.mxu0 %v565
          %657 = vmatpush.msra.mxu0 %v564
          %658 = vmatpush.msra.mxu0 %v563
          %659 = vmatpush.msra.mxu0 %v562
          %660 = vmatpush.msra.mxu0 %v561
          %661 = vmatpush.msra.mxu0 %v560
          %662 = vmatmul.f32.gmra.mxu0 %v581
          %v663 = vpop.f32.mrf.mxu0
          %v664 = vadd.f32 %v644, %v663
          %665 = vdwg.mxu0
          %v666 = vadd.f32 %v511, %v664
          %vm667 = vcmask 254976
          %668 = vst.msk [vmem:[#allocation2] sm:$0x3] %vm667, %v666
        $region56: #{tpu_custom_call.1} parent=47 // pred_fallthru
          _
        %p669 = scmp.eq.s32.totalorder %s24, 1
        // Predicated region
        $region57: #{tpu_custom_call.1} parent=47 // pred_check
          %p670 = pneg %p669
        $region58: #{tpu_custom_call.1} parent=47 // pred_check_branch
          %672 = sbr.rel (%p670) target = $region60
        $region59: #{tpu_custom_call.1} parent=47 // pred_region
          %v673 = vld [vmem:[#allocation2] sm:$0x3]
          %v674 = vld [vmem:[%s2] sm:$0x1]
          %v676 = vperm.slane %v674, 0
          %v678 = vadd.f32 %v673, %v676
          %v679 = vmax.f32 %v678, 0.0
          %vm680 = vcmask 254976
          %681 = vst.msk [vmem:[#allocation2] sm:$0x3] %vm680, %v679
        $region60: #{tpu_custom_call.1} parent=47 // pred_fallthru
          _
        %p682 = scmp.ge.s32.totalorder %s24, 2
        // Predicated region
        $region61: #{tpu_custom_call.1} parent=47 // pred_check
          %p683 = pneg %p682
        $region62: #{tpu_custom_call.1} parent=47 // pred_check_branch
          %685 = sbr.rel (%p683) target = $region64
        $region63: #{tpu_custom_call.1} parent=47 // pred_region
          %v686 = vld [vmem:[#allocation2] sm:$0x3]
          %v687 = vld [vmem:[%s467] sm:$0xff]
          %v688 = vld [vmem:[%s467 + $0x8] sm:$0xff]
          %v689 = vld [vmem:[%s467 + $0x10] sm:$0xff]
          %v690 = vld [vmem:[%s467 + $0x18] sm:$0xff]
          %v691 = vld [vmem:[%s476] sm:$0x1]
          %v693 = vperm.slane %v691, 0
          %vm695 = vcmask 261120
          %v697 = vsel %vm695, %v686, 0
          %699 = vmatpush.msra.mxu0 0.0
          %700 = vmatpush.msra.mxu0 0.0
          %701 = vmatpush.msra.mxu0 0.0
          %702 = vmatpush.msra.mxu0 0.0
          %703 = vmatpush.msra.mxu0 0.0
          %704 = vmatpush.msra.mxu0 0.0
          %705 = vmatpush.msra.mxu0 0.0
          %706 = vmatpush.msra.mxu0 0.0
          %707 = vmatpush.msra.mxu0 0.0
          %708 = vmatpush.msra.mxu0 0.0
          %709 = vmatpush.msra.mxu0 0.0
          %710 = vmatpush.msra.mxu0 0.0
          %711 = vmatpush.msra.mxu0 %v690
          %712 = vmatpush.msra.mxu0 %v689
          %713 = vmatpush.msra.mxu0 %v688
          %714 = vmatpush.msra.mxu0 %v687
          %715 = vmatmul.f32.gmra.mxu0 %v697
          %v716 = vpop.f32.mrf.mxu0
          %v717 = vadd.f32 %v693, %v716
          %718 = vdwg.mxu0
          %v719 = vmax.f32 %v717, 0.0
          %v720 = vld [vmem:[%s487] sm:$0xff]
          %v721 = vld [vmem:[%s487 + $0x8] sm:$0xff]
          %v722 = vld [vmem:[%s487 + $0x10] sm:$0xff]
          %v723 = vld [vmem:[%s487 + $0x18] sm:$0xff]
          %v724 = vld [vmem:[%s496] sm:$0x1]
          %v726 = vperm.slane %v724, 0
          %v729 = vsel %vm695, %v719, 0
          %731 = vmatpush.msra.mxu0 0.0
          %732 = vmatpush.msra.mxu0 0.0
          %733 = vmatpush.msra.mxu0 0.0
          %734 = vmatpush.msra.mxu0 0.0
          %735 = vmatpush.msra.mxu0 0.0
          %736 = vmatpush.msra.mxu0 0.0
          %737 = vmatpush.msra.mxu0 0.0
          %738 = vmatpush.msra.mxu0 0.0
          %739 = vmatpush.msra.mxu0 0.0
          %740 = vmatpush.msra.mxu0 0.0
          %741 = vmatpush.msra.mxu0 0.0
          %742 = vmatpush.msra.mxu0 0.0
          %743 = vmatpush.msra.mxu0 %v723
          %744 = vmatpush.msra.mxu0 %v722
          %745 = vmatpush.msra.mxu0 %v721
          %746 = vmatpush.msra.mxu0 %v720
          %747 = vmatmul.f32.gmra.mxu0 %v729
          %v748 = vpop.f32.mrf.mxu0
          %v749 = vadd.f32 %v726, %v748
          %750 = vdwg.mxu0
          %v751 = vadd.f32 %v686, %v749
          %v752 = vmax.f32 %v751, 0.0
          %vm753 = vcmask 254976
          %754 = vst.msk [vmem:[#allocation2] sm:$0x3] %vm753, %v752
        $region64: #{tpu_custom_call.1} parent=47 // pred_fallthru
          _
        %p755 = scmp.eq.s32.totalorder %s24, 3
        // Predicated region
        $region65: #{tpu_custom_call.1} parent=47 // pred_check
          %p756 = pneg %p755
        $region66: #{tpu_custom_call.1} parent=47 // pred_check_branch
          %758 = sbr.rel (%p756) target = $region68
        $region67: #{tpu_custom_call.1} parent=47 // pred_region
          %v759 = vld [vmem:[#allocation2] sm:$0x3]
          %vm760 = vcmask 254976
          %761 = vst.msk [vmem:[#allocation3] sm:$0x3] %vm760, %v759
        $region68: #{tpu_custom_call.1} parent=47 // pred_fallthru
          _
        // Predicated region
        $region69: #{tpu_custom_call.1} parent=47 // pred_check
          %p762 = pneg %p260
        $region70: #{tpu_custom_call.1} parent=47 // pred_check_branch
          %764 = sbr.rel (%p762) target = $region72
        $region71: #{tpu_custom_call.1} parent=47 // pred_region
          %766 = vsyncadd [#allocation4], 0
          %s767 = smul.addr %s23, 2
          %s768 = scalar_lea.hbm %s7, %s767
          %s770 = sshll.u32 [#allocation3], 4
          %s771 = int_to_ptr.vmem [resolvable:$true] %s770
          %s772 = sshll.u32 %s768, 4
          %s773 = int_to_ptr.hbm [resolvable:$true] %s772
          %775 = dma.vmem_to_hbm [thread:$0]  %s771, 32, %s773, [#allocation4]
        $region72: #{tpu_custom_call.1} parent=47 // pred_fallthru
          _
        // Predicated region
        $region73: #{tpu_custom_call.1} parent=47 // pred_check
          %p776 = pneg %p260
        $region74: #{tpu_custom_call.1} parent=47 // pred_check_branch
          %778 = sbr.rel (%p776) target = $region76
        $region75: #{tpu_custom_call.1} parent=47 // pred_region
          %780 = dma.done [#allocation4], 32
        $region76: #{tpu_custom_call.1} parent=47 // pred_fallthru
          _
      $region48: #{tpu_custom_call.1} parent=5 // pred_fallthru
        _
      %p781 = scmp.le.s32.totalorder 2, %s14
      // Predicated region
      $region77: #{tpu_custom_call.1} parent=5 // pred_check
        %p782 = pneg %p781
      $region78: #{tpu_custom_call.1} parent=5 // pred_check_branch
        %784 = sbr.rel (%p782) target = $region80
      $region79: #{tpu_custom_call.1} parent=5 // pred_region
        %s785 = ssub.s32 %s14, 2
      $region80: #{tpu_custom_call.1} parent=5 // pred_fallthru
        _
    $region6: #{tpu_custom_call.1} parent=1 // loop_footer
      %s18 = sadd.s32 1, %s14
    $region7: #{tpu_custom_call.1} parent=1 // loop_footer_branch
      %13 = sbr.rel target = $region3
    $region8: #{tpu_custom_call.1} parent=1 // loop_exit
      _
    %786 = vsyncpa [#allocation4], 1
    %s787 = scalar_lea.sflag [#allocation4], 1
    %788 = vsyncpa %s787, 1

</llo_original>
